<compile_context>
chip_gen: v7x
topology: tpu7x:2x2x1
jax: 0.10.0
libtpu: 0.0.40
codegen_flags: <defaults>
</compile_context>

<pallas_src>
import jax
import jax.numpy as jnp
from jax.experimental import pallas as pl
from jax.experimental.pallas import tpu as pltpu

_LANE = 128  # lane width / MXU alignment for internal feature dims


def _round_up(x: int, m: int) -> int:
    return (x + m - 1) // m * m


def _sublane_pack(dtype) -> int:
    """Sublane packing granularity: 8 for 4-byte, 16 for 2-byte, 32 for 1-byte."""
    itemsize = jnp.dtype(dtype).itemsize
    return max(8, 8 * (4 // itemsize))


def _vmem_capacity_bytes() -> int:
    """Per-core VMEM capacity; conservative (v7x) fallback if query fails."""
    try:
        info = pltpu.get_tpu_info()
        cap = getattr(info, "vmem_capacity_bytes", None)
        if cap:
            return int(cap)
    except Exception:
        pass
    return 64 << 20


# --------------------------------------------------------------------------
# One-time parameter prep (amortized outside the per-call path).
# --------------------------------------------------------------------------
def prepare_mlp_params(weights, biases):
    """Pad ONLY the internal (hidden) feature dims to multiples of 128 and
    reshape biases to (1, out).  The input dim of layer 0 and the output dim
    of the last layer stay unpadded so x / out need no per-call pad/slice.
    Zero padding keeps the math exact (padded rows/cols/bias lanes are zero).
    weights[i]: (in_i, out_i)  (already transposed from torch)."""
    n = len(weights)
    params = []
    for li, (w, b) in enumerate(zip(weights, biases)):
        in_d, out_d = w.shape
        in_p = in_d if li == 0 else _round_up(in_d, _LANE)
        out_p = out_d if li == n - 1 else _round_up(out_d, _LANE)
        wp = jnp.zeros((in_p, out_p), dtype=w.dtype).at[:in_d, :out_d].set(w)
        bp = jnp.zeros((1, out_p), dtype=b.dtype).at[0, :out_d].set(b)
        params += [wp, bp]
    return tuple(params)


# --------------------------------------------------------------------------
# Kernel
# --------------------------------------------------------------------------
def _make_mlp_kernel(num_layers: int, act_dtype):
    """Kernel refs: (x_tile, w0, b0, ..., w_{L-1}, b_{L-1}, out_tile)."""

    def kernel(*refs):
        x_ref = refs[0]
        o_ref = refs[-1]
        params = refs[1:-1]  # alternating (weight, bias) refs, VMEM-resident

        h = x_ref[...]
        for i in range(num_layers):
            w = params[2 * i][...]        # (in_i, out_i)  (internal dims 128-padded)
            b = params[2 * i + 1][...]    # (1, out_i)
            acc = jnp.dot(h, w, preferred_element_type=jnp.float32) + b
            # Feed narrow-dtype operands to the next MXU matmul; f32 accumulate
            # is kept via preferred_element_type.  No-op for f32 inputs.
            h = acc.astype(act_dtype) if i < num_layers - 1 else acc
            # dropout after every layer except the first: identity (eval mode)
        o_ref[...] = h.astype(o_ref.dtype)

    return kernel


# --------------------------------------------------------------------------
# VMEM budgeting / tile selection
# --------------------------------------------------------------------------
def _estimate_vmem_bytes(tm, in_dim, out_dim, feat_dims, itemsize,
                         param_bytes, weight_bufs, x_bufs):
    x_bytes = x_bufs * tm * in_dim * itemsize
    out_bytes = 2 * tm * out_dim * itemsize
    max_feat = max(feat_dims)
    # During layer i both the incoming and outgoing f32 activations are live,
    # plus the narrow-dtype copy handed to the next matmul.
    interm_bytes = 2 * tm * max_feat * 4 + tm * max_feat * itemsize
    return weight_bufs * param_bytes + x_bytes + out_bytes + interm_bytes


def _pick_tile_m(batch, dtype, budget, in_dim, out_dim, feat_dims,
                 param_bytes, weight_bufs, x_bufs):
    pack = _sublane_pack(dtype)
    itemsize = jnp.dtype(dtype).itemsize
    full = _round_up(batch, pack)
    cands = sorted({min(c, full) for c in (1024, 512, 256, 128, pack)},
                   reverse=True)
    for tm in cands:
        if _estimate_vmem_bytes(tm, in_dim, out_dim, feat_dims, itemsize,
                                param_bytes, weight_bufs, x_bufs) <= budget:
            return tm
    return cands[-1]


# --------------------------------------------------------------------------
# Forward wrapper
# --------------------------------------------------------------------------
def mlp_forward(x, prepared_params):
    """x: (B, dim).  prepared_params: output of prepare_mlp_params()."""
    num_layers = len(prepared_params) // 2
    batch, in_dim = x.shape
    out_dim = int(prepared_params[-2].shape[1])
    dtype = x.dtype
    itemsize = jnp.dtype(dtype).itemsize

    param_bytes = sum(int(p.size) * jnp.dtype(p.dtype).itemsize
                      for p in prepared_params)
    feat_dims = [in_dim] + [int(prepared_params[2 * i].shape[1])
                            for i in range(num_layers)]

    cap = _vmem_capacity_bytes()
    budget = int(cap * 0.85)  # headroom for compiler-internal scratch / spills

    # Small per-tile compute (small hidden dims) -> deepen the x pipeline.
    deep_x_bufs = 3 if max(feat_dims) <= 2048 else 2

    def build(single_buffer_weights: bool):
        w_bufs = 1 if single_buffer_weights else 2
        x_bufs = deep_x_bufs if single_buffer_weights else 2

        if w_bufs * param_bytes > budget:
            raise NotImplementedError(
                "resident weights exceed the VMEM budget; weight-tiling "
                "fallback is not implemented")  # TODO(synk): tile over N/K.

        tm = _pick_tile_m(batch, dtype, budget, in_dim, out_dim, feat_dims,
                          param_bytes, w_bufs, x_bufs)
        grid = (pl.cdiv(batch, tm),)  # partial last tile is masked by Pallas

        if single_buffer_weights:
            x_spec = pl.BlockSpec((tm, in_dim), lambda i: (i, 0),
                                  pipeline_mode=pl.Buffered(x_bufs))
        else:
            x_spec = pl.BlockSpec((tm, in_dim), lambda i: (i, 0))

        in_specs = [x_spec]
        for li in range(num_layers):
            w_shape = tuple(prepared_params[2 * li].shape)
            b_shape = tuple(prepared_params[2 * li + 1].shape)
            if single_buffer_weights:
                in_specs.append(pl.BlockSpec(w_shape, lambda i: (0, 0),
                                             pipeline_mode=pl.Buffered(1)))
                in_specs.append(pl.BlockSpec(b_shape, lambda i: (0, 0),
                                             pipeline_mode=pl.Buffered(1)))
            else:
                in_specs.append(pl.BlockSpec(w_shape, lambda i: (0, 0)))
                in_specs.append(pl.BlockSpec(b_shape, lambda i: (0, 0)))
        out_specs = pl.BlockSpec((tm, out_dim), lambda i: (i, 0))

        needed = _estimate_vmem_bytes(tm, in_dim, out_dim, feat_dims, itemsize,
                                      param_bytes, w_bufs, x_bufs)
        vmem_limit = int(min(max(needed + (4 << 20), 16 << 20), budget))

        return pl.pallas_call(
            _make_mlp_kernel(num_layers, dtype),
            out_shape=jax.ShapeDtypeStruct((batch, out_dim), dtype),
            grid=grid,
            in_specs=in_specs,
            out_specs=out_specs,
            compiler_params=pltpu.CompilerParams(
                dimension_semantics=("parallel",),
                vmem_limit_bytes=vmem_limit,
            ),
        )

    try:
        # Preferred path: single-buffered resident weights + deeper x pipeline.
        return build(single_buffer_weights=True)(x, *prepared_params)
    except Exception:
        # Robust fallback: default double-buffering (no pipeline_mode).
        return build(single_buffer_weights=False)(x, *prepared_params)


def init_mlp_params(key, dim, model_dim, num_layers=3, dtype=jnp.float32):
    """Mirrors nn.Linear's U(-1/sqrt(fan_in), 1/sqrt(fan_in)) init.
    Returns weights already transposed to (in, out)."""
    sizes = [(dim, model_dim)] \
        + [(model_dim, model_dim) for _ in range(num_layers - 2)] \
        + [(model_dim, dim)]
    weights, biases = [], []
    for (fan_in, fan_out) in sizes:
        key, kw, kb = jax.random.split(key, 3)
        bound = 1.0 / (fan_in ** 0.5)
        weights.append(jax.random.uniform(kw, (fan_in, fan_out), dtype,
                                          minval=-bound, maxval=bound))
        biases.append(jax.random.uniform(kb, (fan_out,), dtype,
                                         minval=-bound, maxval=bound))
    return weights, biases


def mlp_module_forward(x, prepared_params, dim):
    """Full module forward: returns (hidden, sigma) like the PyTorch module."""
    hidden = mlp_forward(x, prepared_params)
    sigma = jnp.eye(dim, dtype=x.dtype)  # non-trainable buffer, passed through
    return hidden, sigma


if __name__ == "__main__":
    key = jax.random.PRNGKey(0)

    batch = 8
    dim = 16
    model_dim = 32
    num_layers = 3

    key, kx = jax.random.split(key)
    x = jax.random.normal(kx, (batch, dim), dtype=jnp.float32)

    weights, biases = init_mlp_params(key, dim, model_dim, num_layers)
    prepared = prepare_mlp_params(weights, biases)  # one-time prep, amortized

    hidden, sigma = mlp_module_forward(x, prepared, dim)
    jax.block_until_ready((hidden, sigma))

    # shapes must match the PyTorch module's output
    assert hidden.shape == (batch, dim)
    assert sigma.shape == (dim, dim)

    # cross-check the Pallas kernel against a plain-JAX reference
    ref = x
    for w, b in zip(weights, biases):
        ref = ref @ w + b  # dropout == identity in eval mode
    # (f32 inputs: inter-layer cast is a no-op, so tight tolerance holds;
    #  bf16 inputs would need a looser tolerance.)
    assert jnp.allclose(hidden, ref, atol=1e-5, rtol=1e-5)
    assert jnp.allclose(sigma, jnp.eye(dim, dtype=x.dtype))

    print("KERNEL_OK")
</pallas_src>

<mosaic_0001>
module attributes {stable_mosaic.version = 11 : i64} {
  func.func @kernel(%arg0: i32, %arg1: memref<8x16xf32, #tpu.memory_space<vmem>>, %arg2: memref<16x128xf32, #tpu.memory_space<vmem>>, %arg3: memref<1x128xf32, #tpu.memory_space<vmem>>, %arg4: memref<128x128xf32, #tpu.memory_space<vmem>>, %arg5: memref<1x128xf32, #tpu.memory_space<vmem>>, %arg6: memref<128x16xf32, #tpu.memory_space<vmem>>, %arg7: memref<1x16xf32, #tpu.memory_space<vmem>>, %arg8: memref<8x16xf32, #tpu.memory_space<vmem>>) attributes {dimension_semantics = [#tpu.dimension_semantics<parallel>], iteration_bounds = array<i64: 1>, scalar_prefetch = 0 : i64, scratch_operands = 0 : i64, tpu.core_type = #tpu.core_type<tc>, window_params = [{transform_indices = @transform_0, window_bounds = array<i64: 8, 16>}, {pipeline_mode = #tpu.pipeline_mode<synchronous>, transform_indices = @transform_1, window_bounds = array<i64: 16, 128>}, {pipeline_mode = #tpu.pipeline_mode<synchronous>, transform_indices = @transform_2, window_bounds = array<i64: 1, 128>}, {pipeline_mode = #tpu.pipeline_mode<synchronous>, transform_indices = @transform_3, window_bounds = array<i64: 128, 128>}, {pipeline_mode = #tpu.pipeline_mode<synchronous>, transform_indices = @transform_4, window_bounds = array<i64: 1, 128>}, {pipeline_mode = #tpu.pipeline_mode<synchronous>, transform_indices = @transform_5, window_bounds = array<i64: 128, 16>}, {pipeline_mode = #tpu.pipeline_mode<synchronous>, transform_indices = @transform_6, window_bounds = array<i64: 1, 16>}, {transform_indices = @transform_7, window_bounds = array<i64: 8, 16>}]} {
    %c0 = arith.constant 0 : index
    %c0_0 = arith.constant 0 : index
    %0 = vector.load %arg1[%c0, %c0_0] : memref<8x16xf32, #tpu.memory_space<vmem>>, vector<8x16xf32>
    %c0_1 = arith.constant 0 : index
    %c0_2 = arith.constant 0 : index
    %1 = vector.load %arg2[%c0_1, %c0_2] : memref<16x128xf32, #tpu.memory_space<vmem>>, vector<16x128xf32>
    %c0_3 = arith.constant 0 : index
    %c0_4 = arith.constant 0 : index
    %2 = vector.load %arg3[%c0_3, %c0_4] : memref<1x128xf32, #tpu.memory_space<vmem>>, vector<1x128xf32>
    %cst = arith.constant dense<0.000000e+00> : vector<8x128xf32>
    %3 = tpu.matmul %0, %1, %cst {dimension_numbers = #tpu.dot_dimension_numbers<[1], [0], [0], [1], [0, 0, 1, 1], [], []>} : vector<8x16xf32>, vector<16x128xf32>, vector<8x128xf32> -> vector<8x128xf32>
    %4 = vector.broadcast %2 : vector<1x128xf32> to vector<8x128xf32>
    %5 = arith.addf %3, %4 : vector<8x128xf32>
    %c0_5 = arith.constant 0 : index
    %c0_6 = arith.constant 0 : index
    %6 = vector.load %arg4[%c0_5, %c0_6] : memref<128x128xf32, #tpu.memory_space<vmem>>, vector<128x128xf32>
    %c0_7 = arith.constant 0 : index
    %c0_8 = arith.constant 0 : index
    %7 = vector.load %arg5[%c0_7, %c0_8] : memref<1x128xf32, #tpu.memory_space<vmem>>, vector<1x128xf32>
    %cst_9 = arith.constant dense<0.000000e+00> : vector<8x128xf32>
    %8 = tpu.matmul %5, %6, %cst_9 {dimension_numbers = #tpu.dot_dimension_numbers<[1], [0], [0], [1], [0, 0, 1, 1], [], []>} : vector<8x128xf32>, vector<128x128xf32>, vector<8x128xf32> -> vector<8x128xf32>
    %9 = vector.broadcast %7 : vector<1x128xf32> to vector<8x128xf32>
    %10 = arith.addf %8, %9 : vector<8x128xf32>
    %c0_10 = arith.constant 0 : index
    %c0_11 = arith.constant 0 : index
    %11 = vector.load %arg6[%c0_10, %c0_11] : memref<128x16xf32, #tpu.memory_space<vmem>>, vector<128x16xf32>
    %c0_12 = arith.constant 0 : index
    %c0_13 = arith.constant 0 : index
    %12 = vector.load %arg7[%c0_12, %c0_13] : memref<1x16xf32, #tpu.memory_space<vmem>>, vector<1x16xf32>
    %cst_14 = arith.constant dense<0.000000e+00> : vector<8x16xf32>
    %13 = tpu.matmul %10, %11, %cst_14 {dimension_numbers = #tpu.dot_dimension_numbers<[1], [0], [0], [1], [0, 0, 1, 1], [], []>} : vector<8x128xf32>, vector<128x16xf32>, vector<8x16xf32> -> vector<8x16xf32>
    %14 = vector.broadcast %12 : vector<1x16xf32> to vector<8x16xf32>
    %15 = arith.addf %13, %14 : vector<8x16xf32>
    %c0_15 = arith.constant 0 : index
    %c0_16 = arith.constant 0 : index
    %16 = vector.load %arg8[%c0_15, %c0_16] : memref<8x16xf32, #tpu.memory_space<vmem>>, vector<8x16xf32>
    tpu.vector_store %arg8[%c0_15, %c0_16], %15 {strides = array<i32>} : memref<8x16xf32, #tpu.memory_space<vmem>>, vector<8x16xf32>,
    return
  }
  func.func @transform_0(%arg0: i32) -> (i32, i32) {
    %c0_i32 = arith.constant 0 : i32
    %c0_i32_0 = arith.constant 0 : i32
    return %arg0, %c0_i32 : i32, i32
  }
  func.func @transform_1(%arg0: i32) -> (i32, i32) {
    %c0_i32 = arith.constant 0 : i32
    %c0_i32_0 = arith.constant 0 : i32
    %c0_i32_1 = arith.constant 0 : i32
    return %c0_i32, %c0_i32_0 : i32, i32
  }
  func.func @transform_2(%arg0: i32) -> (i32, i32) {
    %c0_i32 = arith.constant 0 : i32
    %c0_i32_0 = arith.constant 0 : i32
    %c0_i32_1 = arith.constant 0 : i32
    return %c0_i32, %c0_i32_0 : i32, i32
  }
  func.func @transform_3(%arg0: i32) -> (i32, i32) {
    %c0_i32 = arith.constant 0 : i32
    %c0_i32_0 = arith.constant 0 : i32
    %c0_i32_1 = arith.constant 0 : i32
    return %c0_i32, %c0_i32_0 : i32, i32
  }
  func.func @transform_4(%arg0: i32) -> (i32, i32) {
    %c0_i32 = arith.constant 0 : i32
    %c0_i32_0 = arith.constant 0 : i32
    %c0_i32_1 = arith.constant 0 : i32
    return %c0_i32, %c0_i32_0 : i32, i32
  }
  func.func @transform_5(%arg0: i32) -> (i32, i32) {
    %c0_i32 = arith.constant 0 : i32
    %c0_i32_0 = arith.constant 0 : i32
    %c0_i32_1 = arith.constant 0 : i32
    return %c0_i32, %c0_i32_0 : i32, i32
  }
  func.func @transform_6(%arg0: i32) -> (i32, i32) {
    %c0_i32 = arith.constant 0 : i32
    %c0_i32_0 = arith.constant 0 : i32
    %c0_i32_1 = arith.constant 0 : i32
    return %c0_i32, %c0_i32_0 : i32, i32
  }
  func.func @transform_7(%arg0: i32) -> (i32, i32) {
    %c0_i32 = arith.constant 0 : i32
    %c0_i32_0 = arith.constant 0 : i32
    return %arg0, %c0_i32 : i32, i32
  }
}

</mosaic_0001>

<llo_original>
// kernel: tpu_custom_call.1
$region0: #{tpu_custom_call.1}
  #allocation0 [shape = 'u32[]', space=smem, size = 0x4, offset = 0x4, fixed_abs, tag = 'smem constant byte address 0x4 - core index']
  #allocation1 [shape = 'u32[144,128]{1,0:T(1,128)}', space=vmem, size = 0x12000, scoped, tag = 'internal scratch']
  %s0 = inlined_call_operand.hbm [shape: f32[8,16], index: 0, kind: input, shape index: {}]
  %s1 = inlined_call_operand.vmem [shape: f32[16,128], index: 1, kind: input, shape index: {}]
  %s2 = inlined_call_operand.vmem [shape: f32[1,128], index: 2, kind: input, shape index: {}]
  %s3 = inlined_call_operand.vmem [shape: f32[128,128], index: 3, kind: input, shape index: {}]
  %s4 = inlined_call_operand.vmem [shape: f32[1,128], index: 4, kind: input, shape index: {}]
  %s5 = inlined_call_operand.vmem [shape: f32[128,16], index: 5, kind: input, shape index: {}]
  %s6 = inlined_call_operand.vmem [shape: f32[1,16], index: 6, kind: input, shape index: {}]
  %s7 = inlined_call_operand.hbm [shape: f32[8,16], index: 7, kind: output, shape index: {}]
  %s8 = sld [smem:[#allocation0]]
  $region42: #{tpu_custom_call.1} parent=0
    _
  %s10 = ssub.s32 1, %s8
  %s11 = scalar_select 0, %s10, %s8
  $region1: #{tpu_custom_call.1} parent=0
    #allocation2 [shape = 'u8[4096]{0}', space=vmem, size = 0x1000, scoped, tag = 'input window, operand 0, single buffered']
    #allocation3 [shape = 's32[1]{0}', space=sflag, size = 0x4, scoped, tag = 'scoped memory for tpu_custom_call.1']
    #allocation4 [shape = 's32[1]{0}', space=sflag, size = 0x4, scoped, tag = 'scoped memory for tpu_custom_call.1']
    #allocation5 [shape = 'u8[4096]{0}', space=vmem, size = 0x1000, scoped, tag = 'output window, operand 0, single buffered']
    %12 = vsyncpa [#allocation3], 0
    %13 = vsyncpa [#allocation4], 0
    // Predicated region
    $region2: #{tpu_custom_call.1} parent=1 // pred_check
      _
    $region3: #{tpu_custom_call.1} parent=1 // pred_check_branch
      %15 = sbr.rel (0) target = $region5
    $region4: #{tpu_custom_call.1} parent=1 // pred_region
      %s17 = ssub.s32 128, 128
      %18 = vsyncadd [#allocation3], %s17
      %s20 = sshll.u32 [#allocation2], 4
      %s21 = int_to_ptr.vmem [resolvable:$true] %s20
      %23 = dma.hbm_to_vmem [thread:$0]  %s0, 128, %s21, [#allocation3]
    $region5: #{tpu_custom_call.1} parent=1 // pred_fallthru
      _
    // Predicated region
    $region6: #{tpu_custom_call.1} parent=1 // pred_check
      _
    $region7: #{tpu_custom_call.1} parent=1 // pred_check_branch
      %25 = sbr.rel (0) target = $region9
    $region8: #{tpu_custom_call.1} parent=1 // pred_region
      _
    $region9: #{tpu_custom_call.1} parent=1 // pred_fallthru
      _
    // Predicated region
    $region10: #{tpu_custom_call.1} parent=1 // pred_check
      _
    $region11: #{tpu_custom_call.1} parent=1 // pred_check_branch
      %27 = sbr.rel (0) target = $region13
    $region12: #{tpu_custom_call.1} parent=1 // pred_region
      _
    $region13: #{tpu_custom_call.1} parent=1 // pred_fallthru
      _
    // Predicated region
    $region14: #{tpu_custom_call.1} parent=1 // pred_check
      _
    $region15: #{tpu_custom_call.1} parent=1 // pred_check_branch
      %29 = sbr.rel (0) target = $region17
    $region16: #{tpu_custom_call.1} parent=1 // pred_region
      _
    $region17: #{tpu_custom_call.1} parent=1 // pred_fallthru
      _
    // Predicated region
    $region18: #{tpu_custom_call.1} parent=1 // pred_check
      _
    $region19: #{tpu_custom_call.1} parent=1 // pred_check_branch
      %31 = sbr.rel (0) target = $region21
    $region20: #{tpu_custom_call.1} parent=1 // pred_region
      _
    $region21: #{tpu_custom_call.1} parent=1 // pred_fallthru
      _
    // Predicated region
    $region22: #{tpu_custom_call.1} parent=1 // pred_check
      _
    $region23: #{tpu_custom_call.1} parent=1 // pred_check_branch
      %33 = sbr.rel (0) target = $region25
    $region24: #{tpu_custom_call.1} parent=1 // pred_region
      _
    $region25: #{tpu_custom_call.1} parent=1 // pred_fallthru
      _
    // Predicated region
    $region26: #{tpu_custom_call.1} parent=1 // pred_check
      _
    $region27: #{tpu_custom_call.1} parent=1 // pred_check_branch
      %35 = sbr.rel (0) target = $region29
    $region28: #{tpu_custom_call.1} parent=1 // pred_region
      _
    $region29: #{tpu_custom_call.1} parent=1 // pred_fallthru
      _
    // Predicated region
    $region30: #{tpu_custom_call.1} parent=1 // pred_check
      _
    $region31: #{tpu_custom_call.1} parent=1 // pred_check_branch
      %37 = sbr.rel (0) target = $region33
    $region32: #{tpu_custom_call.1} parent=1 // pred_region
      %38 = dma.done [#allocation3], 128
    $region33: #{tpu_custom_call.1} parent=1 // pred_fallthru
      _
    %v39 = vld [vmem:[#allocation2] sm:$0xff]
    %v40 = vld [vmem:[%s1] sm:$0xff]
    %v41 = vld [vmem:[%s1 + $0x8] sm:$0xff]
    %v42 = vld [vmem:[%s2] sm:$0x1]
    %v44 = vlaneseq
    %v45 = vshrl.u32 %v44, 7
    %v46 = vsub.s32 0, %v45
    %v47 = vrot.slane %v42, %v46
    %vm49 = vcmask 130048
    %v51 = vsel %vm49, %v39, 0
    %53 = vmatprep.subr.mxu0 0.0
    %54 = vmatpush1.msra.mxu0 %v40
    %55 = vmatprep.subr.mxu0 0.0
    %56 = vmatpush1.msra.mxu0 %v41
    %57 = vmatprep.subr.mxu0 0.0
    %58 = vmatpush1.msra.mxu0 0.0
    %59 = vmatprep.subr.mxu0 0.0
    %60 = vmatpush1.msra.mxu0 0.0
    %61 = vmatprep.subr.mxu0 0.0
    %62 = vmatpush1.msra.mxu0 0.0
    %63 = vmatprep.subr.mxu0 0.0
    %64 = vmatpush1.msra.mxu0 0.0
    %65 = vmatprep.subr.mxu0 0.0
    %66 = vmatpush1.msra.mxu0 0.0
    %67 = vmatprep.subr.mxu0 0.0
    %68 = vmatpush1.msra.mxu0 0.0
    %69 = vmatprep.subr.mxu0 0.0
    %70 = vmatpush1.msra.mxu0 0.0
    %71 = vmatprep.subr.mxu0 0.0
    %72 = vmatpush1.msra.mxu0 0.0
    %73 = vmatprep.subr.mxu0 0.0
    %74 = vmatpush1.msra.mxu0 0.0
    %75 = vmatprep.subr.mxu0 0.0
    %76 = vmatpush1.msra.mxu0 0.0
    %77 = vmatprep.subr.mxu0 0.0
    %78 = vmatpush1.msra.mxu0 0.0
    %79 = vmatprep.subr.mxu0 0.0
    %80 = vmatpush1.msra.mxu0 0.0
    %81 = vmatprep.subr.mxu0 0.0
    %82 = vmatpush1.msra.mxu0 0.0
    %83 = vmatprep.subr.mxu0 0.0
    %84 = vmatpush1.msra.mxu0 0.0
    %85 = vmatprep.subr.mxu0 0.0
    %86 = vmatpush1.msra.mxu0 0.0
    %87 = vmatprep.subr.mxu0 0.0
    %88 = vmatpush1.msra.mxu0 0.0
    %89 = vmatprep.subr.mxu0 0.0
    %90 = vmatpush1.msra.mxu0 0.0
    %91 = vmatprep.subr.mxu0 0.0
    %92 = vmatpush1.msra.mxu0 0.0
    %93 = vmatprep.subr.mxu0 0.0
    %94 = vmatpush1.msra.mxu0 0.0
    %95 = vmatprep.subr.mxu0 0.0
    %96 = vmatpush1.msra.mxu0 0.0
    %97 = vmatprep.subr.mxu0 0.0
    %98 = vmatpush1.msra.mxu0 0.0
    %99 = vmatprep.subr.mxu0 0.0
    %100 = vmatpush1.msra.mxu0 0.0
    %101 = vmatprep.subr.mxu0 0.0
    %102 = vmatpush1.msra.mxu0 0.0
    %103 = vmatprep.subr.mxu0 0.0
    %104 = vmatpush1.msra.mxu0 0.0
    %105 = vmatprep.subr.mxu0 0.0
    %106 = vmatpush1.msra.mxu0 0.0
    %107 = vmatprep.subr.mxu0 0.0
    %108 = vmatpush1.msra.mxu0 0.0
    %109 = vmatprep.subr.mxu0 0.0
    %110 = vmatpush1.msra.mxu0 0.0
    %111 = vmatprep.subr.mxu0 0.0
    %112 = vmatpush1.msra.mxu0 0.0
    %113 = vmatprep.subr.mxu0 0.0
    %114 = vmatpush1.msra.mxu0 0.0
    %115 = vmatprep.subr.mxu0 0.0
    %116 = vmatpush1.msra.mxu0 0.0
    %117 = vmatprep.mubr.f32.mxu0 0.0
    %118 = vmatmul.mubr.f32.gmra.mrb[0].mxu0 %v51
    %v119 = vpop.f32.mrb[0].mxu0
    %v120 = vadd.f32 %v47, %v119
    %v121 = vpop.f32.mrb[0].mxu0
    %122 = vdwg.mxu0
    %v123 = vld [vmem:[%s3] sm:$0xff]
    %v124 = vld [vmem:[%s3 + $0x8] sm:$0xff]
    %v125 = vld [vmem:[%s3 + $0x10] sm:$0xff]
    %v126 = vld [vmem:[%s3 + $0x18] sm:$0xff]
    %v127 = vld [vmem:[%s3 + $0x20] sm:$0xff]
    %v128 = vld [vmem:[%s3 + $0x28] sm:$0xff]
    %v129 = vld [vmem:[%s3 + $0x30] sm:$0xff]
    %v130 = vld [vmem:[%s3 + $0x38] sm:$0xff]
    %v131 = vld [vmem:[%s3 + $0x40] sm:$0xff]
    %v132 = vld [vmem:[%s3 + $0x48] sm:$0xff]
    %v133 = vld [vmem:[%s3 + $0x50] sm:$0xff]
    %v134 = vld [vmem:[%s3 + $0x58] sm:$0xff]
    %v135 = vld [vmem:[%s3 + $0x60] sm:$0xff]
    %v136 = vld [vmem:[%s3 + $0x68] sm:$0xff]
    %v137 = vld [vmem:[%s3 + $0x70] sm:$0xff]
    %v138 = vld [vmem:[%s3 + $0x78] sm:$0xff]
    %v139 = vld [vmem:[%s4] sm:$0x1]
    %v141 = vlaneseq
    %v142 = vshrl.u32 %v141, 7
    %v143 = vsub.s32 0, %v142
    %v144 = vrot.slane %v139, %v143
    %146 = vmatprep.subr.mxu0 0.0
    %147 = vmatpush1.msra.mxu0 %v123
    %148 = vmatprep.subr.mxu0 0.0
    %149 = vmatpush1.msra.mxu0 %v124
    %150 = vmatprep.subr.mxu0 0.0
    %151 = vmatpush1.msra.mxu0 %v125
    %152 = vmatprep.subr.mxu0 0.0
    %153 = vmatpush1.msra.mxu0 %v126
    %154 = vmatprep.subr.mxu0 0.0
    %155 = vmatpush1.msra.mxu0 %v127
    %156 = vmatprep.subr.mxu0 0.0
    %157 = vmatpush1.msra.mxu0 %v128
    %158 = vmatprep.subr.mxu0 0.0
    %159 = vmatpush1.msra.mxu0 %v129
    %160 = vmatprep.subr.mxu0 0.0
    %161 = vmatpush1.msra.mxu0 %v130
    %162 = vmatprep.subr.mxu0 0.0
    %163 = vmatpush1.msra.mxu0 %v131
    %164 = vmatprep.subr.mxu0 0.0
    %165 = vmatpush1.msra.mxu0 %v132
    %166 = vmatprep.subr.mxu0 0.0
    %167 = vmatpush1.msra.mxu0 %v133
    %168 = vmatprep.subr.mxu0 0.0
    %169 = vmatpush1.msra.mxu0 %v134
    %170 = vmatprep.subr.mxu0 0.0
    %171 = vmatpush1.msra.mxu0 %v135
    %172 = vmatprep.subr.mxu0 0.0
    %173 = vmatpush1.msra.mxu0 %v136
    %174 = vmatprep.subr.mxu0 0.0
    %175 = vmatpush1.msra.mxu0 %v137
    %176 = vmatprep.subr.mxu0 0.0
    %177 = vmatpush1.msra.mxu0 %v138
    %178 = vmatprep.subr.mxu0 0.0
    %179 = vmatpush1.msra.mxu0 0.0
    %180 = vmatprep.subr.mxu0 0.0
    %181 = vmatpush1.msra.mxu0 0.0
    %182 = vmatprep.subr.mxu0 0.0
    %183 = vmatpush1.msra.mxu0 0.0
    %184 = vmatprep.subr.mxu0 0.0
    %185 = vmatpush1.msra.mxu0 0.0
    %186 = vmatprep.subr.mxu0 0.0
    %187 = vmatpush1.msra.mxu0 0.0
    %188 = vmatprep.subr.mxu0 0.0
    %189 = vmatpush1.msra.mxu0 0.0
    %190 = vmatprep.subr.mxu0 0.0
    %191 = vmatpush1.msra.mxu0 0.0
    %192 = vmatprep.subr.mxu0 0.0
    %193 = vmatpush1.msra.mxu0 0.0
    %194 = vmatprep.subr.mxu0 0.0
    %195 = vmatpush1.msra.mxu0 0.0
    %196 = vmatprep.subr.mxu0 0.0
    %197 = vmatpush1.msra.mxu0 0.0
    %198 = vmatprep.subr.mxu0 0.0
    %199 = vmatpush1.msra.mxu0 0.0
    %200 = vmatprep.subr.mxu0 0.0
    %201 = vmatpush1.msra.mxu0 0.0
    %202 = vmatprep.subr.mxu0 0.0
    %203 = vmatpush1.msra.mxu0 0.0
    %204 = vmatprep.subr.mxu0 0.0
    %205 = vmatpush1.msra.mxu0 0.0
    %206 = vmatprep.subr.mxu0 0.0
    %207 = vmatpush1.msra.mxu0 0.0
    %208 = vmatprep.subr.mxu0 0.0
    %209 = vmatpush1.msra.mxu0 0.0
    %210 = vmatprep.mubr.f32.mxu0 0.0
    %211 = vmatmul.mubr.f32.gmra.mrb[0].mxu0 %v120
    %v212 = vpop.f32.mrb[0].mxu0
    %v213 = vadd.f32 %v144, %v212
    %v214 = vpop.f32.mrb[0].mxu0
    %215 = vdwg.mxu0
    %v216 = vld [vmem:[%s5] sm:$0xff]
    %v217 = vld [vmem:[%s5 + $0x8] sm:$0xff]
    %v218 = vld [vmem:[%s5 + $0x10] sm:$0xff]
    %v219 = vld [vmem:[%s5 + $0x18] sm:$0xff]
    %v220 = vld [vmem:[%s5 + $0x20] sm:$0xff]
    %v221 = vld [vmem:[%s5 + $0x28] sm:$0xff]
    %v222 = vld [vmem:[%s5 + $0x30] sm:$0xff]
    %v223 = vld [vmem:[%s5 + $0x38] sm:$0xff]
    %v224 = vld [vmem:[%s5 + $0x40] sm:$0xff]
    %v225 = vld [vmem:[%s5 + $0x48] sm:$0xff]
    %v226 = vld [vmem:[%s5 + $0x50] sm:$0xff]
    %v227 = vld [vmem:[%s5 + $0x58] sm:$0xff]
    %v228 = vld [vmem:[%s5 + $0x60] sm:$0xff]
    %v229 = vld [vmem:[%s5 + $0x68] sm:$0xff]
    %v230 = vld [vmem:[%s5 + $0x70] sm:$0xff]
    %v231 = vld [vmem:[%s5 + $0x78] sm:$0xff]
    %v232 = vld [vmem:[%s6] sm:$0x1]
    %v234 = vlaneseq
    %v235 = vshrl.u32 %v234, 7
    %v236 = vsub.s32 0, %v235
    %v237 = vrot.slane %v232, %v236
    %239 = vmatprep.subr.mxu0 0.0
    %240 = vmatpush1.msra.mxu0 %v216
    %241 = vmatprep.subr.mxu0 0.0
    %242 = vmatpush1.msra.mxu0 %v217
    %243 = vmatprep.subr.mxu0 0.0
    %244 = vmatpush1.msra.mxu0 %v218
    %245 = vmatprep.subr.mxu0 0.0
    %246 = vmatpush1.msra.mxu0 %v219
    %247 = vmatprep.subr.mxu0 0.0
    %248 = vmatpush1.msra.mxu0 %v220
    %249 = vmatprep.subr.mxu0 0.0
    %250 = vmatpush1.msra.mxu0 %v221
    %251 = vmatprep.subr.mxu0 0.0
    %252 = vmatpush1.msra.mxu0 %v222
    %253 = vmatprep.subr.mxu0 0.0
    %254 = vmatpush1.msra.mxu0 %v223
    %255 = vmatprep.subr.mxu0 0.0
    %256 = vmatpush1.msra.mxu0 %v224
    %257 = vmatprep.subr.mxu0 0.0
    %258 = vmatpush1.msra.mxu0 %v225
    %259 = vmatprep.subr.mxu0 0.0
    %260 = vmatpush1.msra.mxu0 %v226
    %261 = vmatprep.subr.mxu0 0.0
    %262 = vmatpush1.msra.mxu0 %v227
    %263 = vmatprep.subr.mxu0 0.0
    %264 = vmatpush1.msra.mxu0 %v228
    %265 = vmatprep.subr.mxu0 0.0
    %266 = vmatpush1.msra.mxu0 %v229
    %267 = vmatprep.subr.mxu0 0.0
    %268 = vmatpush1.msra.mxu0 %v230
    %269 = vmatprep.subr.mxu0 0.0
    %270 = vmatpush1.msra.mxu0 %v231
    %271 = vmatprep.subr.mxu0 0.0
    %272 = vmatpush1.msra.mxu0 0.0
    %273 = vmatprep.subr.mxu0 0.0
    %274 = vmatpush1.msra.mxu0 0.0
    %275 = vmatprep.subr.mxu0 0.0
    %276 = vmatpush1.msra.mxu0 0.0
    %277 = vmatprep.subr.mxu0 0.0
    %278 = vmatpush1.msra.mxu0 0.0
    %279 = vmatprep.subr.mxu0 0.0
    %280 = vmatpush1.msra.mxu0 0.0
    %281 = vmatprep.subr.mxu0 0.0
    %282 = vmatpush1.msra.mxu0 0.0
    %283 = vmatprep.subr.mxu0 0.0
    %284 = vmatpush1.msra.mxu0 0.0
    %285 = vmatprep.subr.mxu0 0.0
    %286 = vmatpush1.msra.mxu0 0.0
    %287 = vmatprep.subr.mxu0 0.0
    %288 = vmatpush1.msra.mxu0 0.0
    %289 = vmatprep.subr.mxu0 0.0
    %290 = vmatpush1.msra.mxu0 0.0
    %291 = vmatprep.subr.mxu0 0.0
    %292 = vmatpush1.msra.mxu0 0.0
    %293 = vmatprep.subr.mxu0 0.0
    %294 = vmatpush1.msra.mxu0 0.0
    %295 = vmatprep.subr.mxu0 0.0
    %296 = vmatpush1.msra.mxu0 0.0
    %297 = vmatprep.subr.mxu0 0.0
    %298 = vmatpush1.msra.mxu0 0.0
    %299 = vmatprep.subr.mxu0 0.0
    %300 = vmatpush1.msra.mxu0 0.0
    %301 = vmatprep.subr.mxu0 0.0
    %302 = vmatpush1.msra.mxu0 0.0
    %303 = vmatprep.mubr.f32.mxu0 0.0
    %304 = vmatmul.mubr.f32.gmra.mrb[0].mxu0 %v213
    %v305 = vpop.f32.mrb[0].mxu0
    %v306 = vadd.f32 %v237, %v305
    %v307 = vpop.f32.mrb[0].mxu0
    %308 = vdwg.mxu0
    %309 = vst.msk [vmem:[#allocation5] sm:$0xff] %vm49, %v306
    // Predicated region
    $region34: #{tpu_custom_call.1} parent=1 // pred_check
      _
    $region35: #{tpu_custom_call.1} parent=1 // pred_check_branch
      %311 = sbr.rel (0) target = $region37
    $region36: #{tpu_custom_call.1} parent=1 // pred_region
      %s313 = ssub.s32 128, 128
      %314 = vsyncadd [#allocation4], %s313
      %s316 = sshll.u32 [#allocation5], 4
      %s317 = int_to_ptr.vmem [resolvable:$true] %s316
      %319 = dma.vmem_to_hbm [thread:$0]  %s317, 128, %s7, [#allocation4]
    $region37: #{tpu_custom_call.1} parent=1 // pred_fallthru
      _
    // Predicated region
    $region38: #{tpu_custom_call.1} parent=1 // pred_check
      _
    $region39: #{tpu_custom_call.1} parent=1 // pred_check_branch
      %321 = sbr.rel (0) target = $region41
    $region40: #{tpu_custom_call.1} parent=1 // pred_region
      %322 = dma.done [#allocation4], 128
    $region41: #{tpu_custom_call.1} parent=1 // pred_fallthru
      _
    %323 = vsyncpa [#allocation3], 1
    %324 = vsyncpa [#allocation4], 1

</llo_original>
